<compile_context>
chip_gen: v6e
topology: v6e:2x2x1
jax: 0.10.0
libtpu: 0.0.40
codegen_flags: <defaults>
</compile_context>

<pallas_src>
import jax
import jax.numpy as jnp
from jax.experimental import pallas as pl
from jax.experimental.pallas import tpu as pltpu


# ---------------------------------------------------------------------------
# Kernel 1: packed 1x1-conv QKV projection (run once over x)
# ---------------------------------------------------------------------------
def _project_qkv_kernel(x_ref, w_ref, b_ref, q_ref, k_ref, v_ref):
    """x_ref: (1, C, tn) f32; w_ref: (D, C) bf16 packed [Wv; Wq; Wk];
    b_ref: (D, 1) f32.  One bf16 MXU pass per tile; the row slices of the
    packed result land at sublane offsets C and C+Cq (multiples of 8), so no
    lane shuffles are needed."""
    C = x_ref.shape[1]
    D = w_ref.shape[0]
    Cq = (D - C) // 2

    x_bf = x_ref[0].astype(jnp.bfloat16)                                  # (C, tn)
    proj = jnp.dot(w_ref[...], x_bf,
                   preferred_element_type=jnp.float32) + b_ref[...]       # (D, tn) f32
    v_ref[0] = proj[:C].astype(jnp.bfloat16)                              # (C,  tn)
    q_ref[0] = proj[C:C + Cq].astype(jnp.bfloat16)                        # (Cq, tn)
    k_ref[0] = proj[C + Cq:].astype(jnp.bfloat16)                         # (Cq, tn)


def _project_qkv(x_cn, w_all, b_all, Cq, tn):
    B, C, N = x_cn.shape
    D = w_all.shape[0]
    return pl.pallas_call(
        _project_qkv_kernel,
        out_shape=(
            jax.ShapeDtypeStruct((B, Cq, N), jnp.bfloat16),   # q (channel-major)
            jax.ShapeDtypeStruct((B, Cq, N), jnp.bfloat16),   # k (channel-major)
            jax.ShapeDtypeStruct((B, C, N), jnp.bfloat16),    # v (channel-major)
        ),
        grid_spec=pltpu.PrefetchScalarGridSpec(
            num_scalar_prefetch=0,
            grid=(B, N // tn),
            in_specs=[
                pl.BlockSpec((1, C, tn), lambda b, n: (b, 0, n)),
                pl.BlockSpec((D, C), lambda b, n: (0, 0)),
                pl.BlockSpec((D, 1), lambda b, n: (0, 0)),
            ],
            out_specs=[
                pl.BlockSpec((1, Cq, tn), lambda b, n: (b, 0, n)),
                pl.BlockSpec((1, Cq, tn), lambda b, n: (b, 0, n)),
                pl.BlockSpec((1, C, tn), lambda b, n: (b, 0, n)),
            ],
        ),
        compiler_params=pltpu.CompilerParams(
            dimension_semantics=("parallel", "parallel")),
    )(x_cn, w_all, b_all)


# ---------------------------------------------------------------------------
# Kernel 2: flash-style attention over precomputed bf16 Q/K/V (channel-major)
# ---------------------------------------------------------------------------
def _attention_kernel(gamma_ref, x_ref, q_ref, k_ref, v_ref, o_ref,
                      m_sc, l_sc, acc_sc):
    ki = pl.program_id(2)
    nk = pl.num_programs(2)

    @pl.when(ki == 0)
    def _():
        m_sc[...] = jnp.full_like(m_sc, -jnp.inf)
        l_sc[...] = jnp.zeros_like(l_sc)
        acc_sc[...] = jnp.zeros_like(acc_sc)

    q_t = q_ref[0]                       # (Cq, tq) bf16, queries on lanes
    k_t = k_ref[0]                       # (tk, Cq) bf16, keys on sublanes
    v_t = v_ref[0]                       # (C,  tk) bf16

    # sT[j, i] = <k_j, q_i>  (== torch attention[i, j]); softmax over j = axis 0.
    sT = jnp.dot(k_t, q_t, preferred_element_type=jnp.float32)           # (tk, tq)

    m_prev = m_sc[...]
    m_new = jnp.maximum(m_prev, jnp.max(sT, axis=0, keepdims=True))      # (1, tq)
    alpha = jnp.exp(m_prev - m_new)                                      # (1, tq)
    p = jnp.exp(sT - m_new)                                              # (tk, tq)
    l_sc[...] = alpha * l_sc[...] + jnp.sum(p, axis=0, keepdims=True)
    acc_sc[...] = alpha * acc_sc[...] + jnp.dot(                         # (C, tq)
        v_t, p.astype(jnp.bfloat16), preferred_element_type=jnp.float32)
    m_sc[...] = m_new

    @pl.when(ki == nk - 1)
    def _():
        out = acc_sc[...] * pl.reciprocal(l_sc[...], approx=True)        # (C, tq)
        o_ref[0] = (gamma_ref[0] * out + x_ref[0]).astype(o_ref.dtype)


def _attention(x_cn, q_cn, k_nd, v_cn, gamma_arr, tq, tk):
    B, C, N = x_cn.shape
    Cq = q_cn.shape[1]
    return pl.pallas_call(
        _attention_kernel,
        out_shape=jax.ShapeDtypeStruct((B, C, N), x_cn.dtype),
        grid_spec=pltpu.PrefetchScalarGridSpec(
            num_scalar_prefetch=0,
            grid=(B, N // tq, N // tk),
            in_specs=[
                pl.BlockSpec(memory_space=pltpu.MemorySpace.SMEM),          # gamma
                pl.BlockSpec((1, C, tq), lambda b, qi, ki: (b, 0, qi)),     # x residual
                pl.BlockSpec((1, Cq, tq), lambda b, qi, ki: (b, 0, qi)),    # q (Cq, tq)
                # TODO(synk): if profiling shows exposed DMA latency on small
                # k/v tiles, add pipeline_mode=pl.Buffered(3) on these specs.
                pl.BlockSpec((1, tk, Cq), lambda b, qi, ki: (b, ki, 0)),    # k rows (tk, Cq)
                pl.BlockSpec((1, C, tk), lambda b, qi, ki: (b, 0, ki)),     # v (C, tk)
            ],
            out_specs=pl.BlockSpec((1, C, tq), lambda b, qi, ki: (b, 0, qi)),
            scratch_shapes=[
                pltpu.VMEM((1, tq), jnp.float32),   # running max m
                pltpu.VMEM((1, tq), jnp.float32),   # running denominator l
                pltpu.VMEM((C, tq), jnp.float32),   # output accumulator
            ],
        ),
        compiler_params=pltpu.CompilerParams(
            dimension_semantics=("parallel", "parallel", "arbitrary")),
    )(gamma_arr, x_cn, q_cn, k_nd, v_cn)


# ---------------------------------------------------------------------------
# Wrapper (NCHW in/out, matching the PyTorch module)
# ---------------------------------------------------------------------------
def _pick_tile(n, preferred):
    """Largest multiple of 128 dividing n, capped near `preferred`; falls back
    to a single full-extent tile (always block-legal) for awkward n."""
    if n % 128 == 0:
        t = max(128, min(n, (preferred // 128) * 128))
        while t > 128 and n % t:
            t -= 128
        if n % t == 0:
            return t
    # TODO(synk): pad N to a multiple of 128 for large awkward W*H; a full-size
    # tile makes the (N, N) score intermediate the VMEM limiter.
    return n


def self_attention_pallas(x_nchw, wq, bq, wk, bk, wv, bv, gamma, *,
                          tq=None, tk=None, tn=None):
    """x_nchw: (B, C, W, H) f32; wq/wk: (Cq, C); wv: (C, C); biases 1-D; gamma scalar."""
    B, C, W, H = x_nchw.shape
    N = W * H
    Cq = wq.shape[0]
    assert C % 8 == 0 and Cq >= 1

    x_cn = x_nchw.reshape(B, C, N)                    # free reshape, stays channel-major
    gamma_arr = jnp.reshape(gamma, (1,)).astype(jnp.float32)

    # Packed [Wv; Wq; Wk] projection weight (bf16 MXU operand) + f32 bias column.
    w_all = jnp.concatenate([wv, wq, wk], axis=0).astype(jnp.bfloat16)    # (D, C)
    b_all = jnp.concatenate([bv, bq, bk]).astype(jnp.float32)[:, None]    # (D, 1)

    if tn is None:
        tn = _pick_tile(N, 512)
    if tq is None:
        tq = _pick_tile(N, 256)
    if tk is None:
        tk = _pick_tile(N, 512)
    assert N % tn == 0 and N % tq == 0 and N % tk == 0, "tiles must divide N"

    q_cn, k_cn, v_cn = _project_qkv(x_cn, w_all, b_all, Cq, tn)
    # Keys are consumed row-major (N, Cq) so the score matmul is a natural MXU
    # NN dot.  This swapaxes only touches B*N*Cq bf16 bytes (C/8 channels at
    # half width) — ~1/32 of one pass over x, vs. the two full x transposes the
    # previous version paid in the wrapper.
    k_nd = jnp.swapaxes(k_cn, 1, 2)                   # (B, N, Cq) bf16

    out_cn = _attention(x_cn, q_cn, k_nd, v_cn, gamma_arr, tq, tk)
    return out_cn.reshape(B, C, W, H)


def self_attention_ref(x_nchw, wq, bq, wk, bk, wv, bv, gamma):
    """Pure-JAX reference mirroring the PyTorch forward exactly (f32 throughout)."""
    B, C, W, H = x_nchw.shape
    N = W * H
    x_flat = x_nchw.reshape(B, C, N)                                     # (B, C, N)
    proj_q = jnp.einsum('oc,bcn->bon', wq, x_flat) + bq[None, :, None]   # (B, Cq, N)
    proj_k = jnp.einsum('oc,bcn->bon', wk, x_flat) + bk[None, :, None]   # (B, Cq, N)
    proj_v = jnp.einsum('oc,bcn->bon', wv, x_flat) + bv[None, :, None]   # (B, C, N)
    attn = jnp.einsum('bqn,bqm->bnm', proj_q, proj_k)                    # (B, N, N)
    attn = jax.nn.softmax(attn, axis=-1)
    out = jnp.einsum('bcn,bmn->bcm', proj_v, attn)                       # (B, C, N)
    return gamma * out.reshape(B, C, W, H) + x_nchw


if __name__ == "__main__":
    key = jax.random.PRNGKey(0)
    B, C, W, H = 2, 64, 8, 8                 # in_channels=64 -> query/key channels = 8
    Cq = C // 8

    keys = jax.random.split(key, 8)
    x = jax.random.normal(keys[0], (B, C, W, H), dtype=jnp.float32)
    wq = 0.1 * jax.random.normal(keys[1], (Cq, C), dtype=jnp.float32)
    bq = 0.1 * jax.random.normal(keys[2], (Cq,), dtype=jnp.float32)
    wk = 0.1 * jax.random.normal(keys[3], (Cq, C), dtype=jnp.float32)
    bk = 0.1 * jax.random.normal(keys[4], (Cq,), dtype=jnp.float32)
    wv = 0.1 * jax.random.normal(keys[5], (C, C), dtype=jnp.float32)
    bv = 0.1 * jax.random.normal(keys[6], (C,), dtype=jnp.float32)
    # nn.Parameter(torch.zeros(1)) initializes gamma to 0; use a nonzero value
    # so the attention path is actually exercised by the check.
    gamma = jnp.float32(0.5)

    # Tolerances reflect bf16 MXU inputs everywhere + approx softmax reciprocal.
    TOL_MAX, TOL_MEAN = 6e-2, 6e-3

    # Case 1: tiny 8x8 map -> single full-extent tile per batch element.
    out = jax.block_until_ready(
        self_attention_pallas(x, wq, bq, wk, bk, wv, bv, gamma))
    ref = jax.block_until_ready(
        self_attention_ref(x, wq, bq, wk, bk, wv, bv, gamma))
    assert out.shape == (B, C, W, H)
    err = jnp.abs(out - ref)
    assert float(err.max()) < TOL_MAX and float(err.mean()) < TOL_MEAN, (
        f"case1 max={float(err.max())} mean={float(err.mean())}")

    # Case 2: 16x16 map with explicit 128-wide tiles so the online softmax runs
    # across multiple KV tiles (grid = (B, 2, 2)).
    W2 = H2 = 16
    x2 = jax.random.normal(keys[7], (B, C, W2, H2), dtype=jnp.float32)
    out2 = jax.block_until_ready(
        self_attention_pallas(x2, wq, bq, wk, bk, wv, bv, gamma,
                              tq=128, tk=128, tn=128))
    ref2 = jax.block_until_ready(
        self_attention_ref(x2, wq, bq, wk, bk, wv, bv, gamma))
    assert out2.shape == (B, C, W2, H2)
    err2 = jnp.abs(out2 - ref2)
    assert float(err2.max()) < TOL_MAX and float(err2.mean()) < TOL_MEAN, (
        f"case2 max={float(err2.max())} mean={float(err2.mean())}")

    print("KERNEL_OK")
</pallas_src>

<mosaic_0001>
module attributes {stable_mosaic.version = 11 : i64} {
  func.func @_project_qkv_kernel(%arg0: i32, %arg1: i32, %arg2: memref<1x64x64xf32, #tpu.memory_space<vmem>>, %arg3: memref<80x64xbf16, #tpu.memory_space<vmem>>, %arg4: memref<80x1xf32, #tpu.memory_space<vmem>>, %arg5: memref<1x8x64xbf16, #tpu.memory_space<vmem>>, %arg6: memref<1x8x64xbf16, #tpu.memory_space<vmem>>, %arg7: memref<1x64x64xbf16, #tpu.memory_space<vmem>>) attributes {dimension_semantics = [#tpu.dimension_semantics<parallel>, #tpu.dimension_semantics<parallel>], iteration_bounds = array<i64: 2, 1>, scalar_prefetch = 0 : i64, scratch_operands = 0 : i64, tpu.core_type = #tpu.core_type<tc>, window_params = [{transform_indices = @transform_0, window_bounds = array<i64: 1, 64, 64>}, {pipeline_mode = #tpu.pipeline_mode<synchronous>, transform_indices = @transform_1, window_bounds = array<i64: 80, 64>}, {pipeline_mode = #tpu.pipeline_mode<synchronous>, transform_indices = @transform_2, window_bounds = array<i64: 80, 1>}, {transform_indices = @transform_3, window_bounds = array<i64: 1, 8, 64>}, {transform_indices = @transform_4, window_bounds = array<i64: 1, 8, 64>}, {transform_indices = @transform_5, window_bounds = array<i64: 1, 64, 64>}]} {
    %c0 = arith.constant 0 : index
    %c0_0 = arith.constant 0 : index
    %c0_1 = arith.constant 0 : index
    %0 = vector.load %arg2[%c0, %c0_0, %c0_1] : memref<1x64x64xf32, #tpu.memory_space<vmem>>, vector<1x64x64xf32>
    %1 = vector.shape_cast %0 : vector<1x64x64xf32> to vector<64x64xf32>
    %2 = arith.truncf %1 : vector<64x64xf32> to vector<64x64xbf16>
    %c0_2 = arith.constant 0 : index
    %c0_3 = arith.constant 0 : index
    %3 = vector.load %arg3[%c0_2, %c0_3] : memref<80x64xbf16, #tpu.memory_space<vmem>>, vector<80x64xbf16>
    %cst = arith.constant dense<0.000000e+00> : vector<80x64xf32>
    %4 = tpu.matmul %3, %2, %cst {dimension_numbers = #tpu.dot_dimension_numbers<[1], [0], [0], [1], [0, 0, 1, 1], [], []>} : vector<80x64xbf16>, vector<64x64xbf16>, vector<80x64xf32> -> vector<80x64xf32>
    %c0_4 = arith.constant 0 : index
    %c0_5 = arith.constant 0 : index
    %5 = vector.load %arg4[%c0_4, %c0_5] : memref<80x1xf32, #tpu.memory_space<vmem>>, vector<80x1xf32>
    %6 = vector.broadcast %5 : vector<80x1xf32> to vector<80x64xf32>
    %7 = arith.addf %4, %6 : vector<80x64xf32>
    %8 = vector.extract_strided_slice %7 {offsets = [0, 0], sizes = [64, 64], strides = [1, 1]} : vector<80x64xf32> to vector<64x64xf32>
    %9 = arith.truncf %8 : vector<64x64xf32> to vector<64x64xbf16>
    %c0_6 = arith.constant 0 : index
    %c0_7 = arith.constant 0 : index
    %c0_8 = arith.constant 0 : index
    %10 = vector.load %arg7[%c0_6, %c0_7, %c0_8] : memref<1x64x64xbf16, #tpu.memory_space<vmem>>, vector<1x64x64xbf16>
    %11 = vector.shape_cast %10 : vector<1x64x64xbf16> to vector<64x64xbf16>
    %12 = vector.shape_cast %9 : vector<64x64xbf16> to vector<1x64x64xbf16>
    tpu.vector_store %arg7[%c0_6, %c0_7, %c0_8], %12 {strides = array<i32>} : memref<1x64x64xbf16, #tpu.memory_space<vmem>>, vector<1x64x64xbf16>,
    %13 = vector.extract_strided_slice %7 {offsets = [64, 0], sizes = [8, 64], strides = [1, 1]} : vector<80x64xf32> to vector<8x64xf32>
    %14 = arith.truncf %13 : vector<8x64xf32> to vector<8x64xbf16>
    %c0_9 = arith.constant 0 : index
    %c0_10 = arith.constant 0 : index
    %c0_11 = arith.constant 0 : index
    %15 = vector.load %arg5[%c0_9, %c0_10, %c0_11] : memref<1x8x64xbf16, #tpu.memory_space<vmem>>, vector<1x8x64xbf16>
    %16 = vector.shape_cast %15 : vector<1x8x64xbf16> to vector<8x64xbf16>
    %17 = vector.shape_cast %14 : vector<8x64xbf16> to vector<1x8x64xbf16>
    tpu.vector_store %arg5[%c0_9, %c0_10, %c0_11], %17 {strides = array<i32>} : memref<1x8x64xbf16, #tpu.memory_space<vmem>>, vector<1x8x64xbf16>,
    %18 = vector.extract_strided_slice %7 {offsets = [72, 0], sizes = [8, 64], strides = [1, 1]} : vector<80x64xf32> to vector<8x64xf32>
    %19 = arith.truncf %18 : vector<8x64xf32> to vector<8x64xbf16>
    %c0_12 = arith.constant 0 : index
    %c0_13 = arith.constant 0 : index
    %c0_14 = arith.constant 0 : index
    %20 = vector.load %arg6[%c0_12, %c0_13, %c0_14] : memref<1x8x64xbf16, #tpu.memory_space<vmem>>, vector<1x8x64xbf16>
    %21 = vector.shape_cast %20 : vector<1x8x64xbf16> to vector<8x64xbf16>
    %22 = vector.shape_cast %19 : vector<8x64xbf16> to vector<1x8x64xbf16>
    tpu.vector_store %arg6[%c0_12, %c0_13, %c0_14], %22 {strides = array<i32>} : memref<1x8x64xbf16, #tpu.memory_space<vmem>>, vector<1x8x64xbf16>,
    return
  }
  func.func @transform_0(%arg0: i32, %arg1: i32) -> (i32, i32, i32) {
    %c0_i32 = arith.constant 0 : i32
    %c0_i32_0 = arith.constant 0 : i32
    return %arg0, %c0_i32, %arg1 : i32, i32, i32
  }
  func.func @transform_1(%arg0: i32, %arg1: i32) -> (i32, i32) {
    %c0_i32 = arith.constant 0 : i32
    %c0_i32_0 = arith.constant 0 : i32
    %c0_i32_1 = arith.constant 0 : i32
    return %c0_i32, %c0_i32_0 : i32, i32
  }
  func.func @transform_2(%arg0: i32, %arg1: i32) -> (i32, i32) {
    %c0_i32 = arith.constant 0 : i32
    %c0_i32_0 = arith.constant 0 : i32
    %c0_i32_1 = arith.constant 0 : i32
    return %c0_i32, %c0_i32_0 : i32, i32
  }
  func.func @transform_3(%arg0: i32, %arg1: i32) -> (i32, i32, i32) {
    %c0_i32 = arith.constant 0 : i32
    %c0_i32_0 = arith.constant 0 : i32
    return %arg0, %c0_i32, %arg1 : i32, i32, i32
  }
  func.func @transform_4(%arg0: i32, %arg1: i32) -> (i32, i32, i32) {
    %c0_i32 = arith.constant 0 : i32
    %c0_i32_0 = arith.constant 0 : i32
    return %arg0, %c0_i32, %arg1 : i32, i32, i32
  }
  func.func @transform_5(%arg0: i32, %arg1: i32) -> (i32, i32, i32) {
    %c0_i32 = arith.constant 0 : i32
    %c0_i32_0 = arith.constant 0 : i32
    return %arg0, %c0_i32, %arg1 : i32, i32, i32
  }
}

</mosaic_0001>

<llo_original>
// kernel: tpu_custom_call.1
$region0: #{tpu_custom_call.1}
  #allocation0 [shape = 'u32[]', space=smem, size = 0x4, offset = 0x4, fixed_abs, tag = 'smem constant byte address 0x4 - core index']
  #allocation1 [shape = 'u32[144,128]{1,0:T(1,128)}', space=vmem, size = 0x12000, scoped, tag = 'internal scratch']
  %s0 = inlined_call_operand.vmem [shape: f32[2,64,64], index: 0, kind: input, shape index: {}]
  %s1 = inlined_call_operand.vmem [shape: bf16[80,64], index: 1, kind: input, shape index: {}]
  %s2 = inlined_call_operand.vmem [shape: f32[80,1], index: 2, kind: input, shape index: {}]
  %s3 = inlined_call_operand.hbm [shape: bf16[2,8,64], index: 3, kind: output, shape index: {0}]
  %s4 = inlined_call_operand.hbm [shape: bf16[2,8,64], index: 4, kind: output, shape index: {1}]
  %s5 = inlined_call_operand.hbm [shape: bf16[2,64,64], index: 5, kind: output, shape index: {2}]
  %6 = xla_tuple %s3, %s4, %s5
  %s7 = sld [smem:[#allocation0]]
  $region61: #{tpu_custom_call.1} parent=0
    _
  %s9 = ssub.s32 1, %s7
  %s10 = scalar_select 0, %s9, %s7
  $region1: #{tpu_custom_call.1} parent=0
    #allocation2 [shape = 'u8[4096]{0}', space=vmem, size = 0x1000, scoped, tag = 'output window, operand 0']
    #allocation3 [shape = 's32[2]{0}', space=sflag, size = 0x8, scoped, tag = 'scoped memory for tpu_custom_call.1']
    #allocation4 [shape = 'u8[4096]{0}', space=vmem, size = 0x1000, scoped, tag = 'output window, operand 1']
    #allocation5 [shape = 's32[2]{0}', space=sflag, size = 0x8, scoped, tag = 'scoped memory for tpu_custom_call.1']
    #allocation6 [shape = 'u8[32768]{0}', space=vmem, size = 0x8000, scoped, tag = 'output window, operand 2']
    %11 = vsyncpa [#allocation3], 0
    %s12 = scalar_lea.sflag [#allocation3], 1
    %13 = vsyncpa %s12, 0
    %14 = vsyncpa [#allocation5], 0
    %s15 = scalar_lea.sflag [#allocation5], 1
    %16 = vsyncpa %s15, 0
    loop: start=0, step=1, limit=4
    $region2: #{tpu_custom_call.1} parent=1 // loop_pre_header
      _
    $region3: #{tpu_custom_call.1} parent=1 // loop_header
      %s18 = sphi 0, %s22
      %p19 = scmp.ge.s32.totalorder %s18, 4
      %s25 = sphi 0, %s37
      %s26 = sphi 0, %s33
      %s27 = sphi 0, %s25
      %s28 = sphi 0, %s26
      %s29 = sphi 0, %s27
      %s30 = sphi 0, %s28
      %s42 = sphi 0, %s44
      %s45 = sphi 0, %s42
      %s46 = sphi 0, %s45
      %s62 = sphi 0, %s46
      %s66 = sphi 0, %s66
      %s68 = sphi 0, %s66
      %s69 = sphi 0, %s68
      %s83 = sphi 0, %s69
      %s87 = sphi 0, %s87
      %s89 = sphi 0, %s87
      %s90 = sphi 0, %s89
      %s104 = sphi 0, %s90
      %s112 = sphi 0, %s114
      %s115 = sphi 0, %s112
      %s116 = sphi 0, %s115
      %s132 = sphi 0, %s116
      %s140 = sphi 0, %s142
      %s143 = sphi 0, %s140
      %s144 = sphi 0, %s143
      %s160 = sphi 0, %s144
      %s168 = sphi 0, %s170
      %s171 = sphi 0, %s168
      %s172 = sphi 0, %s171
      %s188 = sphi 0, %s172
    $region4: #{tpu_custom_call.1} parent=1 // loop_header_branch
      %21 = sbr.rel (%p19) target = $region8
    $region5: #{tpu_custom_call.1} parent=1 // loop_body
      %s23 = ssub.s32 %s18, 1
      %s24 = ssub.s32 %s18, 2
      %s31 = sadd.s32 1, %s26
      %p32 = scmp.ge.s32.totalorder %s31, 1
      %s33 = scalar_select %p32, 0, %s31
      %s34 = sadd.s32 1, %s25
      %s35 = scalar_select %p32, %s34, %s25
      %p36 = scmp.ge.s32.totalorder %s35, 2
      %s37 = scalar_select %p36, 0, %s35
      %s38 = ssub.s32 %s25, %s37
      %s39 = ssub.s32 %s26, %s33
      %s40 = sor.u32 %s38, %s39
      %p41 = scmp.eq.s32.totalorder %s40, 0
      %s43 = sadd.s32 %s42, 1
      %s44 = scalar_select %p41, %s42, %s43
      %p47 = pneg %p41
      %p48 = scmp.eq.s32.totalorder %s18, 1
      %p49 = por %p47, %p48
      %p50 = scmp.ne.s32.totalorder %s42, %s45
      %p51 = scmp.eq.s32.totalorder %s18, 0
      %p52 = por %p50, %p51
      %p53 = scmp.ne.s32.totalorder %s42, %s45
      %p54 = scmp.eq.s32.totalorder %s23, 1
      %p55 = por %p53, %p54
      %p56 = scmp.ne.s32.totalorder %s45, %s46
      %p57 = scmp.eq.s32.totalorder %s23, 0
      %p58 = por %p56, %p57
      %p59 = scmp.ne.s32.totalorder %s45, %s46
      %p60 = scmp.eq.s32.totalorder %s24, 1
      %p61 = por %p59, %p60
      %p63 = scmp.ne.s32.totalorder %s46, %s62
      %p64 = scmp.eq.s32.totalorder %s24, 0
      %p65 = por %p63, %p64
      %s67 = sadd.s32 %s66, 1
      %p70 = scmp.eq.s32.totalorder %s18, 1
      %p71 = scmp.ne.s32.totalorder %s66, %s68
      %p72 = scmp.eq.s32.totalorder %s18, 0
      %p73 = por %p71, %p72
      %p74 = scmp.ne.s32.totalorder %s66, %s68
      %p75 = scmp.eq.s32.totalorder %s23, 1
      %p76 = por %p74, %p75
      %p77 = scmp.ne.s32.totalorder %s68, %s69
      %p78 = scmp.eq.s32.totalorder %s23, 0
      %p79 = por %p77, %p78
      %p80 = scmp.ne.s32.totalorder %s68, %s69
      %p81 = scmp.eq.s32.totalorder %s24, 1
      %p82 = por %p80, %p81
      %p84 = scmp.ne.s32.totalorder %s69, %s83
      %p85 = scmp.eq.s32.totalorder %s24, 0
      %p86 = por %p84, %p85
      %s88 = sadd.s32 %s87, 1
      %p91 = scmp.eq.s32.totalorder %s18, 1
      %p92 = scmp.ne.s32.totalorder %s87, %s89
      %p93 = scmp.eq.s32.totalorder %s18, 0
      %p94 = por %p92, %p93
      %p95 = scmp.ne.s32.totalorder %s87, %s89
      %p96 = scmp.eq.s32.totalorder %s23, 1
      %p97 = por %p95, %p96
      %p98 = scmp.ne.s32.totalorder %s89, %s90
      %p99 = scmp.eq.s32.totalorder %s23, 0
      %p100 = por %p98, %p99
      %p101 = scmp.ne.s32.totalorder %s89, %s90
      %p102 = scmp.eq.s32.totalorder %s24, 1
      %p103 = por %p101, %p102
      %p105 = scmp.ne.s32.totalorder %s90, %s104
      %p106 = scmp.eq.s32.totalorder %s24, 0
      %p107 = por %p105, %p106
      %s108 = ssub.s32 %s25, %s37
      %s109 = ssub.s32 %s26, %s33
      %s110 = sor.u32 %s108, %s109
      %p111 = scmp.eq.s32.totalorder %s110, 0
      %s113 = sadd.s32 %s112, 1
      %s114 = scalar_select %p111, %s112, %s113
      %p117 = pneg %p111
      %p118 = scmp.eq.s32.totalorder %s18, 1
      %p119 = por %p117, %p118
      %p120 = scmp.ne.s32.totalorder %s112, %s115
      %p121 = scmp.eq.s32.totalorder %s18, 0
      %p122 = por %p120, %p121
      %p123 = scmp.ne.s32.totalorder %s112, %s115
      %p124 = scmp.eq.s32.totalorder %s23, 1
      %p125 = por %p123, %p124
      %p126 = scmp.ne.s32.totalorder %s115, %s116
      %p127 = scmp.eq.s32.totalorder %s23, 0
      %p128 = por %p126, %p127
      %p129 = scmp.ne.s32.totalorder %s115, %s116
      %p130 = scmp.eq.s32.totalorder %s24, 1
      %p131 = por %p129, %p130
      %p133 = scmp.ne.s32.totalorder %s116, %s132
      %p134 = scmp.eq.s32.totalorder %s24, 0
      %p135 = por %p133, %p134
      %s136 = ssub.s32 %s25, %s37
      %s137 = ssub.s32 %s26, %s33
      %s138 = sor.u32 %s136, %s137
      %p139 = scmp.eq.s32.totalorder %s138, 0
      %s141 = sadd.s32 %s140, 1
      %s142 = scalar_select %p139, %s140, %s141
      %p145 = pneg %p139
      %p146 = scmp.eq.s32.totalorder %s18, 1
      %p147 = por %p145, %p146
      %p148 = scmp.ne.s32.totalorder %s140, %s143
      %p149 = scmp.eq.s32.totalorder %s18, 0
      %p150 = por %p148, %p149
      %p151 = scmp.ne.s32.totalorder %s140, %s143
      %p152 = scmp.eq.s32.totalorder %s23, 1
      %p153 = por %p151, %p152
      %p154 = scmp.ne.s32.totalorder %s143, %s144
      %p155 = scmp.eq.s32.totalorder %s23, 0
      %p156 = por %p154, %p155
      %p157 = scmp.ne.s32.totalorder %s143, %s144
      %p158 = scmp.eq.s32.totalorder %s24, 1
      %p159 = por %p157, %p158
      %p161 = scmp.ne.s32.totalorder %s144, %s160
      %p162 = scmp.eq.s32.totalorder %s24, 0
      %p163 = por %p161, %p162
      %s164 = ssub.s32 %s25, %s37
      %s165 = ssub.s32 %s26, %s33
      %s166 = sor.u32 %s164, %s165
      %p167 = scmp.eq.s32.totalorder %s166, 0
      %s169 = sadd.s32 %s168, 1
      %s170 = scalar_select %p167, %s168, %s169
      %p173 = pneg %p167
      %p174 = scmp.eq.s32.totalorder %s18, 1
      %p175 = por %p173, %p174
      %p176 = scmp.ne.s32.totalorder %s168, %s171
      %p177 = scmp.eq.s32.totalorder %s18, 0
      %p178 = por %p176, %p177
      %p179 = scmp.ne.s32.totalorder %s168, %s171
      %p180 = scmp.eq.s32.totalorder %s23, 1
      %p181 = por %p179, %p180
      %p182 = scmp.ne.s32.totalorder %s171, %s172
      %p183 = scmp.eq.s32.totalorder %s23, 0
      %p184 = por %p182, %p183
      %p185 = scmp.ne.s32.totalorder %s171, %s172
      %p186 = scmp.eq.s32.totalorder %s24, 1
      %p187 = por %p185, %p186
      %p189 = scmp.ne.s32.totalorder %s172, %s188
      %p190 = scmp.eq.s32.totalorder %s24, 0
      %p191 = por %p189, %p190
      %p192 = scmp.le.s32.totalorder 1, %s18
      %p193 = scmp.lt.s32.totalorder %s18, 3
      %p194 = pnand %p192, %p193
      %p195 = pneg %p194
      // Predicated region
      $region9: #{tpu_custom_call.1} parent=5 // pred_check
        _
      $region10: #{tpu_custom_call.1} parent=5 // pred_check_branch
        %197 = sbr.rel (%p194) target = $region12
      $region11: #{tpu_custom_call.1} parent=5 // pred_region
        %s198 = ssub.s32 %s18, 1
        // Predicated region
        $region13: #{tpu_custom_call.1} parent=11 // pred_check
          %p199 = pneg %p79
        $region14: #{tpu_custom_call.1} parent=11 // pred_check_branch
          %201 = sbr.rel (%p199) target = $region16
        $region15: #{tpu_custom_call.1} parent=11 // pred_region
          _
        $region16: #{tpu_custom_call.1} parent=11 // pred_fallthru
          _
        // Predicated region
        $region17: #{tpu_custom_call.1} parent=11 // pred_check
          %p202 = pneg %p100
        $region18: #{tpu_custom_call.1} parent=11 // pred_check_branch
          %204 = sbr.rel (%p202) target = $region20
        $region19: #{tpu_custom_call.1} parent=11 // pred_region
          _
        $region20: #{tpu_custom_call.1} parent=11 // pred_fallthru
          _
      $region12: #{tpu_custom_call.1} parent=5 // pred_fallthru
        _
      %p205 = scmp.lt.s32.totalorder %s18, 2
      // Predicated region
      $region21: #{tpu_custom_call.1} parent=5 // pred_check
        %p206 = pneg %p205
      $region22: #{tpu_custom_call.1} parent=5 // pred_check_branch
        %208 = sbr.rel (%p206) target = $region24
      $region23: #{tpu_custom_call.1} parent=5 // pred_region
        // Predicated region
        $region25: #{tpu_custom_call.1} parent=23 // pred_check
          %p209 = pneg %p52
        $region26: #{tpu_custom_call.1} parent=23 // pred_check_branch
          %211 = sbr.rel (%p209) target = $region28
        $region27: #{tpu_custom_call.1} parent=23 // pred_region
          %p212 = scmp.lt.s32.totalorder %s25, 1
          %s213 = scalar_select %p212, %s25, 1
          %p214 = scmp.lt.s32.totalorder %s26, 0
          %s215 = scalar_select %p214, %s26, 0
          %s216 = smul.addr %s213, 8
          %s217 = sadd.s32 %s215, %s216
          %s218 = smul.addr %s217, 8
          %s219 = scalar_lea.vmem %s0, %s218
        $region28: #{tpu_custom_call.1} parent=23 // pred_fallthru
          _
      $region24: #{tpu_custom_call.1} parent=5 // pred_fallthru
        _
      %p220 = scmp.le.s32.totalorder 1, %s18
      %p221 = scmp.lt.s32.totalorder %s18, 3
      %p222 = pnand %p220, %p221
      %p223 = pneg %p222
      // Predicated region
      $region29: #{tpu_custom_call.1} parent=5 // pred_check
        _
      $region30: #{tpu_custom_call.1} parent=5 // pred_check_branch
        %225 = sbr.rel (%p222) target = $region32
      $region31: #{tpu_custom_call.1} parent=5 // pred_region
        %s226 = ssub.s32 %s18, 1
        %p227 = scmp.lt.s32.totalorder %s27, 1
        %s228 = scalar_select %p227, %s27, 1
        %p229 = scmp.lt.s32.totalorder %s28, 0
        %s230 = scalar_select %p229, %s28, 0
        %s231 = smul.addr %s228, 8
        %s232 = sadd.s32 %s230, %s231
        %s233 = smul.addr %s232, 8
        %s234 = scalar_lea.vmem %s0, %s233
        %p235 = pneg %p58
        %p236 = pneg %p55
        %p237 = pneg %p79
        %p238 = pneg %p76
        %p239 = pneg %p100
        %p240 = pneg %p97
        %p241 = pneg %p128
        %p242 = pneg %p125
        %s243 = sand.u32 %s115, 1
        %s244 = scalar_lea.sflag [#allocation3], %s243
        %s245 = sand.u32 %s115, 1
        %s246 = smul.addr %s245, 4
        %s247 = scalar_lea.vmem [#allocation2], %s246
        %p248 = pneg %p156
        %p249 = pneg %p153
        %s250 = sand.u32 %s23, 1
        %s251 = scalar_lea.sflag [#allocation5], %s250
        %s252 = sand.u32 %s143, 1
        %s253 = smul.addr %s252, 4
        %s254 = scalar_lea.vmem [#allocation4], %s253
        %p255 = pneg %p184
        %p256 = pneg %p181
        %s257 = sand.u32 %s23, 1
        %s258 = scalar_lea.sflag [#allocation5], %s257
        %s259 = sand.u32 %s171, 1
        %s260 = smul.addr %s259, 32
        %s261 = scalar_lea.vmem [#allocation6], %s260
        %p262 = scmp.lt.s32.totalorder %s27, 1
        %s263 = scalar_select %p262, %s27, 1
        %p264 = scmp.lt.s32.totalorder %s28, 0
        %s265 = scalar_select %p264, %s28, 0
        %s266 = smul.addr %s263, 8
        %s267 = sadd.s32 %s265, %s266
        %s268 = smul.addr %s267, 8
        %s269 = scalar_lea.vmem %s0, %s268
        %v271 = vld [vmem:[%s269] sm:$0xff]
        %v272 = vld [vmem:[%s269 + $0x8] sm:$0xff]
        %v273 = vld [vmem:[%s269 + $0x10] sm:$0xff]
        %v274 = vld [vmem:[%s269 + $0x18] sm:$0xff]
        %v275 = vld [vmem:[%s269 + $0x20] sm:$0xff]
        %v276 = vld [vmem:[%s269 + $0x28] sm:$0xff]
        %v277 = vld [vmem:[%s269 + $0x30] sm:$0xff]
        %v278 = vld [vmem:[%s269 + $0x38] sm:$0xff]
        %v279 = vpack.c.bf16 %v272, %v271
        %v280 = vpack.c.bf16 %v274, %v273
        %v281 = vpack.c.bf16 %v276, %v275
        %v282 = vpack.c.bf16 %v278, %v277
        %v283 = vld [vmem:[%s1] sm:$0xf]
        %v284 = vld [vmem:[%s1 + $0x4] sm:$0xf]
        %v285 = vld [vmem:[%s1 + $0x8] sm:$0xf]
        %v286 = vld [vmem:[%s1 + $0xc] sm:$0xf]
        %v287 = vld [vmem:[%s1 + $0x10] sm:$0xf]
        %v288 = vld [vmem:[%s1 + $0x14] sm:$0xf]
        %v289 = vld [vmem:[%s1 + $0x18] sm:$0xf]
        %v290 = vld [vmem:[%s1 + $0x1c] sm:$0xf]
        %v291 = vld [vmem:[%s1 + $0x20] sm:$0xf]
        %v292 = vld [vmem:[%s1 + $0x24] sm:$0xf]
        %v293 = vld [vmem:[%s2] sm:$0xff]
        %v294 = vld [vmem:[%s2 + $0x8] sm:$0xff]
        %v295 = vld [vmem:[%s2 + $0x10] sm:$0xff]
        %v296 = vld [vmem:[%s2 + $0x18] sm:$0xff]
        %v297 = vld [vmem:[%s2 + $0x20] sm:$0xff]
        %v298 = vld [vmem:[%s2 + $0x28] sm:$0xff]
        %v299 = vld [vmem:[%s2 + $0x30] sm:$0xff]
        %v300 = vld [vmem:[%s2 + $0x38] sm:$0xff]
        %v301 = vld [vmem:[%s2 + $0x40] sm:$0xff]
        %v302 = vld [vmem:[%s2 + $0x48] sm:$0xff]
        %304 = vset.pattern.permute.xlu0 0
        %305 = vperm.xlu0 %304, %v293
        %v306 = vpop.permute.xlu0 %305
        %309 = vset.pattern.permute.xlu0 0
        %310 = vperm.xlu0 %309, %v294
        %v311 = vpop.permute.xlu0 %310
        %314 = vset.pattern.permute.xlu0 0
        %315 = vperm.xlu0 %314, %v295
        %v316 = vpop.permute.xlu0 %315
        %319 = vset.pattern.permute.xlu0 0
        %320 = vperm.xlu0 %319, %v296
        %v321 = vpop.permute.xlu0 %320
        %324 = vset.pattern.permute.xlu0 0
        %325 = vperm.xlu0 %324, %v297
        %v326 = vpop.permute.xlu0 %325
        %329 = vset.pattern.permute.xlu0 0
        %330 = vperm.xlu0 %329, %v298
        %v331 = vpop.permute.xlu0 %330
        %334 = vset.pattern.permute.xlu0 0
        %335 = vperm.xlu0 %334, %v299
        %v336 = vpop.permute.xlu0 %335
        %339 = vset.pattern.permute.xlu0 0
        %340 = vperm.xlu0 %339, %v300
        %v341 = vpop.permute.xlu0 %340
        %344 = vset.pattern.permute.xlu0 0
        %345 = vperm.xlu0 %344, %v301
        %v346 = vpop.permute.xlu0 %345
        %349 = vset.pattern.permute.xlu0 0
        %350 = vperm.xlu0 %349, %v302
        %v351 = vpop.permute.xlu0 %350
        %v363 = vunpack.c.l.b16 %v283
        %v364 = vunpack.c.l.b16 %v284
        %v365 = vunpack.c.l.b16 %v285
        %v366 = vunpack.c.l.b16 %v286
        %v367 = vunpack.c.l.b16 %v287
        %v368 = vunpack.c.l.b16 %v288
        %v369 = vunpack.c.l.b16 %v289
        %v370 = vunpack.c.l.b16 %v290
        %v371 = vunpack.c.l.b16 %v291
        %v372 = vunpack.c.l.b16 %v292
        %v373 = vpack.c.b16 %v364, %v363
        %v374 = vpack.c.b16 %v366, %v365
        %v375 = vpack.c.b16 %v368, %v367
        %v376 = vpack.c.b16 %v370, %v369
        %v377 = vpack.c.b16 %v372, %v371
        %vm378 = vcmask 523264
        %v380 = vsel %vm378, %v373, 0
        %v383 = vsel %vm378, %v374, 0
        %v386 = vsel %vm378, %v375, 0
        %v389 = vsel %vm378, %v376, 0
        %v392 = vsel %vm378, %v377, 0
        %394 = vmatprep.subr.bf16.mxu0 0
        %395 = vmatpush1.bf16.msra.mxu0 0
        %396 = vmatprep.subr.bf16.mxu0 0
        %397 = vmatpush1.bf16.msra.mxu0 0
        %398 = vmatprep.subr.bf16.mxu0 0
        %399 = vmatpush1.bf16.msra.mxu0 0
        %400 = vmatprep.subr.bf16.mxu0 0
        %401 = vmatpush1.bf16.msra.mxu0 0
        %402 = vmatprep.subr.bf16.mxu0 0
        %403 = vmatpush1.bf16.msra.mxu0 %v282
        %404 = vmatprep.subr.bf16.mxu0 0
        %405 = vmatpush1.bf16.msra.mxu0 %v281
        %406 = vmatprep.subr.bf16.mxu0 0
        %407 = vmatpush1.bf16.msra.mxu0 %v280
        %408 = vmatprep.subr.bf16.mxu0 0
        %409 = vmatpush1.bf16.msra.mxu0 %v279
        %410 = vmatprep.subr.bf16.mxu0 0
        %411 = vmatpush2.bf16.msra.mxu0 0
        %412 = vmatprep.subr.bf16.mxu0 0
        %413 = vmatpush2.bf16.msra.mxu0 0
        %414 = vmatprep.subr.bf16.mxu0 0
        %415 = vmatpush2.bf16.msra.mxu0 0
        %416 = vmatprep.subr.bf16.mxu0 0
        %417 = vmatpush2.bf16.msra.mxu0 0
        %418 = vmatprep.subr.bf16.mxu0 0
        %419 = vmatpush2.bf16.msra.mxu0 0
        %420 = vmatprep.subr.bf16.mxu0 0
        %421 = vmatpush2.bf16.msra.mxu0 0
        %422 = vmatprep.subr.bf16.mxu0 0
        %423 = vmatpush2.bf16.msra.mxu0 0
        %424 = vmatprep.subr.bf16.mxu0 0
        %425 = vmatpush2.bf16.msra.mxu0 0
        %426 = vmatprep.mubr.bf16.mxu0 0
        %427 = vmatmul.mubr.bf16.gmra.mxu0 %v380
        %v428 = vpop.f32.mrf.mxu0
        %v429 = vadd.f32 %v306, %v428
        %v430 = vpop.f32.mrf.mxu0
        %v431 = vpop.f32.mrf.mxu0
        %v432 = vadd.f32 %v311, %v431
        %v433 = vpop.f32.mrf.mxu0
        %434 = vmatprep.mubr.bf16.mxu0 0
        %435 = vmatmul.mubr.bf16.gmra.mxu0 %v383
        %v436 = vpop.f32.mrf.mxu0
        %v437 = vadd.f32 %v316, %v436
        %v438 = vpop.f32.mrf.mxu0
        %v439 = vpop.f32.mrf.mxu0
        %v440 = vadd.f32 %v321, %v439
        %v441 = vpop.f32.mrf.mxu0
        %442 = vmatprep.mubr.bf16.mxu0 0
        %443 = vmatmul.mubr.bf16.gmra.mxu0 %v386
        %v444 = vpop.f32.mrf.mxu0
        %v445 = vadd.f32 %v326, %v444
        %v446 = vpop.f32.mrf.mxu0
        %v447 = vpop.f32.mrf.mxu0
        %v448 = vadd.f32 %v331, %v447
        %v449 = vpop.f32.mrf.mxu0
        %450 = vmatprep.mubr.bf16.mxu0 0
        %451 = vmatmul.mubr.bf16.gmra.mxu0 %v389
        %v452 = vpop.f32.mrf.mxu0
        %v453 = vadd.f32 %v336, %v452
        %v454 = vpop.f32.mrf.mxu0
        %v455 = vpop.f32.mrf.mxu0
        %v456 = vadd.f32 %v341, %v455
        %v457 = vpop.f32.mrf.mxu0
        %458 = vmatprep.mubr.bf16.mxu0 0
        %459 = vmatmul.mubr.bf16.gmra.mxu0 %v392
        %v460 = vpop.f32.mrf.mxu0
        %v461 = vadd.f32 %v346, %v460
        %v462 = vpop.f32.mrf.mxu0
        %v463 = vpop.f32.mrf.mxu0
        %v464 = vadd.f32 %v351, %v463
        %v465 = vpop.f32.mrf.mxu0
        %466 = vdwg.mxu0
        %v467 = vpack.c.bf16 %v432, %v429
        %v468 = vpack.c.bf16 %v440, %v437
        %v469 = vpack.c.bf16 %v448, %v445
        %v470 = vpack.c.bf16 %v456, %v453
        %v475 = vunpack.c.l.b16 %v467
        %v476 = vunpack.c.h.b16 %v467
        %v477 = vunpack.c.l.b16 %v468
        %v478 = vunpack.c.h.b16 %v468
        %v479 = vunpack.c.l.b16 %v469
        %v480 = vunpack.c.h.b16 %v469
        %v481 = vunpack.c.l.b16 %v470
        %v482 = vunpack.c.h.b16 %v470
        %v483 = vpack.c.b16 %v475, %v475
        %v484 = vpack.c.b16 %v476, %v476
        %v485 = vpack.c.b16 %v477, %v477
        %v486 = vpack.c.b16 %v478, %v478
        %v487 = vpack.c.b16 %v479, %v479
        %v488 = vpack.c.b16 %v480, %v480
        %v489 = vpack.c.b16 %v481, %v481
        %v490 = vpack.c.b16 %v482, %v482
        %vm499 = vcmask 519168
        %500 = vst.msk [vmem:[%s261] sm:$0xf] %vm499, %v483
        %501 = vst.msk [vmem:[%s261 + $0x4] sm:$0xf] %vm499, %v484
        %502 = vst.msk [vmem:[%s261 + $0x8] sm:$0xf] %vm499, %v485
        %503 = vst.msk [vmem:[%s261 + $0xc] sm:$0xf] %vm499, %v486
        %504 = vst.msk [vmem:[%s261 + $0x10] sm:$0xf] %vm499, %v487
        %505 = vst.msk [vmem:[%s261 + $0x14] sm:$0xf] %vm499, %v488
        %506 = vst.msk [vmem:[%s261 + $0x18] sm:$0xf] %vm499, %v489
        %507 = vst.msk [vmem:[%s261 + $0x1c] sm:$0xf] %vm499, %v490
        %v508 = vpack.c.bf16 %v461, %v461
        %509 = vst.msk [vmem:[%s247] sm:$0xf] %vm499, %v508
        %v510 = vpack.c.bf16 %v464, %v464
        %511 = vst.msk [vmem:[%s254] sm:$0xf] %vm499, %v510
        %s512 = sand.u32 %s115, 1
        %s513 = scalar_lea.sflag [#allocation3], %s512
        %s514 = sand.u32 %s115, 1
        %s515 = smul.addr %s514, 4
        %s516 = scalar_lea.vmem [#allocation2], %s515
        %s517 = sand.u32 %s23, 1
        %s518 = scalar_lea.sflag [#allocation5], %s517
        %s519 = sand.u32 %s143, 1
        %s520 = smul.addr %s519, 4
        %s521 = scalar_lea.vmem [#allocation4], %s520
        %s522 = sand.u32 %s23, 1
        %s523 = scalar_lea.sflag [#allocation5], %s522
        %s524 = sand.u32 %s171, 1
        %s525 = smul.addr %s524, 32
        %s526 = scalar_lea.vmem [#allocation6], %s525
        // Predicated region
        $region33: #{tpu_custom_call.1} parent=31 // pred_check
          %p527 = pneg %p125
        $region34: #{tpu_custom_call.1} parent=31 // pred_check_branch
          %529 = sbr.rel (%p527) target = $region36
        $region35: #{tpu_custom_call.1} parent=31 // pred_region
          %s531 = ssub.s32 64, 64
          %532 = vsyncadd %s513, %s531
          %s533 = sadd.s32 %s28, %s27
          %s534 = smul.addr %s533, 64
          %s535 = scalar_lea.hbm %s3, %s534
          %s537 = sshll.u32 %s516, 4
          %s538 = int_to_ptr.vmem [resolvable:$true] %s537
          %540 = dma.vmem_to_hbm [thread:$0]  %s538, 64, %s535, %s513
        $region36: #{tpu_custom_call.1} parent=31 // pred_fallthru
          _
        // Predicated region
        $region37: #{tpu_custom_call.1} parent=31 // pred_check
          %p541 = pneg %p153
        $region38: #{tpu_custom_call.1} parent=31 // pred_check_branch
          %543 = sbr.rel (%p541) target = $region40
        $region39: #{tpu_custom_call.1} parent=31 // pred_region
          %s545 = ssub.s32 64, 64
          %546 = vsyncadd %s518, %s545
          %s547 = sadd.s32 %s28, %s27
          %s548 = smul.addr %s547, 64
          %s549 = scalar_lea.hbm %s4, %s548
          %s551 = sshll.u32 %s521, 4
          %s552 = int_to_ptr.vmem [resolvable:$true] %s551
          %554 = dma.vmem_to_hbm [thread:$0]  %s552, 64, %s549, %s518
        $region40: #{tpu_custom_call.1} parent=31 // pred_fallthru
          _
        // Predicated region
        $region41: #{tpu_custom_call.1} parent=31 // pred_check
          %p555 = pneg %p181
        $region42: #{tpu_custom_call.1} parent=31 // pred_check_branch
          %557 = sbr.rel (%p555) target = $region44
        $region43: #{tpu_custom_call.1} parent=31 // pred_region
          %s559 = ssub.s32 512, 512
          %560 = vsyncadd %s523, %s559
          %s561 = smul.addr %s27, 8
          %s562 = sadd.s32 %s28, %s561
          %s563 = smul.addr %s562, 64
          %s564 = scalar_lea.hbm %s5, %s563
          %s565 = sshll.u32 %s526, 4
          %s566 = int_to_ptr.vmem [resolvable:$true] %s565
          %571 = dma.vmem_to_hbm [thread:$0]  %s566, 512, %s564, %s523, 64, 64, 4
        $region44: #{tpu_custom_call.1} parent=31 // pred_fallthru
          _
      $region32: #{tpu_custom_call.1} parent=5 // pred_fallthru
        _
      %p572 = scmp.le.s32.totalorder 2, %s18
      // Predicated region
      $region45: #{tpu_custom_call.1} parent=5 // pred_check
        %p573 = pneg %p572
      $region46: #{tpu_custom_call.1} parent=5 // pred_check_branch
        %575 = sbr.rel (%p573) target = $region48
      $region47: #{tpu_custom_call.1} parent=5 // pred_region
        %s576 = ssub.s32 %s18, 2
        // Predicated region
        $region49: #{tpu_custom_call.1} parent=47 // pred_check
          %p577 = pneg %p131
        $region50: #{tpu_custom_call.1} parent=47 // pred_check_branch
          %579 = sbr.rel (%p577) target = $region52
        $region51: #{tpu_custom_call.1} parent=47 // pred_region
          %s580 = sand.u32 %s116, 1
          %s581 = scalar_lea.sflag [#allocation3], %s580
          %s582 = sand.u32 %s116, 1
          %s583 = smul.addr %s582, 4
          %s584 = scalar_lea.vmem [#allocation2], %s583
          %585 = dma.done %s581, 64
        $region52: #{tpu_custom_call.1} parent=47 // pred_fallthru
          _
        // Predicated region
        $region53: #{tpu_custom_call.1} parent=47 // pred_check
          %p586 = pneg %p159
        $region54: #{tpu_custom_call.1} parent=47 // pred_check_branch
          %588 = sbr.rel (%p586) target = $region56
        $region55: #{tpu_custom_call.1} parent=47 // pred_region
          %s589 = sand.u32 %s24, 1
          %s590 = scalar_lea.sflag [#allocation5], %s589
          %s591 = sand.u32 %s144, 1
          %s592 = smul.addr %s591, 4
          %s593 = scalar_lea.vmem [#allocation4], %s592
          %594 = dma.done %s590, 64
        $region56: #{tpu_custom_call.1} parent=47 // pred_fallthru
          _
        // Predicated region
        $region57: #{tpu_custom_call.1} parent=47 // pred_check
          %p595 = pneg %p187
        $region58: #{tpu_custom_call.1} parent=47 // pred_check_branch
          %597 = sbr.rel (%p595) target = $region60
        $region59: #{tpu_custom_call.1} parent=47 // pred_region
          %s598 = sand.u32 %s24, 1
          %s599 = scalar_lea.sflag [#allocation5], %s598
          %s600 = sand.u32 %s172, 1
          %s601 = smul.addr %s600, 32
          %s602 = scalar_lea.vmem [#allocation6], %s601
          %603 = dma.done %s599, 512
        $region60: #{tpu_custom_call.1} parent=47 // pred_fallthru
          _
      $region48: #{tpu_custom_call.1} parent=5 // pred_fallthru
        _
    $region6: #{tpu_custom_call.1} parent=1 // loop_footer
      %s22 = sadd.s32 1, %s18
    $region7: #{tpu_custom_call.1} parent=1 // loop_footer_branch
      %17 = sbr.rel target = $region3
    $region8: #{tpu_custom_call.1} parent=1 // loop_exit
      _
    %604 = vsyncpa [#allocation3], 1
    %s605 = scalar_lea.sflag [#allocation3], 1
    %606 = vsyncpa %s605, 1
    %607 = vsyncpa [#allocation5], 1
    %s608 = scalar_lea.sflag [#allocation5], 1
    %609 = vsyncpa %s608, 1

</llo_original>
